<compile_context>
chip_gen: v5e
topology: v5e:2x2
jax: 0.10.0
libtpu: 0.0.40
codegen_flags: <defaults>
</compile_context>

<pallas_src>
import functools

import jax
import jax.numpy as jnp
import numpy as np
from jax.experimental import pallas as pl
from jax.experimental.pallas import tpu as pltpu


def _ldam_kernel(x_ref, tgt_ref, m_ref, ldam_ref, ce_ref, *, s, n_rows, block_rows):
    i = pl.program_id(0)

    @pl.when(i == 0)
    def _():
        ldam_ref[...] = jnp.zeros_like(ldam_ref)
        ce_ref[...] = jnp.zeros_like(ce_ref)

    x = x_ref[...].astype(jnp.float32)           # (TN, C), cast once on-chip
    tgt = tgt_ref[...]                           # (TN, 1) int32
    m_list = m_ref[...].astype(jnp.float32)      # (1, C)
    tn, c = x.shape

    # scatter_(1, target, 1)  ->  one-hot mask via an iota comparison (VPU).
    col_ids = jax.lax.broadcasted_iota(jnp.int32, (tn, c), 1)
    onehot = (col_ids == tgt).astype(jnp.float32)             # (TN, C)

    # Reused one-hot products: margin placed at the target column, target logit,
    # and per-sample margin (== m_list[target]).
    masked_m = onehot * m_list                                 # (TN, C)
    x_t = jnp.sum(x * onehot, axis=1, keepdims=True)           # (TN, 1)
    batch_m = jnp.sum(masked_m, axis=1, keepdims=True)         # (TN, 1)

    # CE on raw logits (single full exp pass over the tile).
    mx = jnp.max(x, axis=1, keepdims=True)                     # (TN, 1)
    sum_exp_x = jnp.sum(jnp.exp(x - mx), axis=1, keepdims=True)
    per_ce = (mx + jnp.log(sum_exp_x)) - x_t                   # (TN, 1)

    if s == 1.0:
        # output differs from x only at the target column -> reuse the exp pass:
        # sum(exp(out - mx)) = sum(exp(x - mx)) - exp(x_t - mx) + exp(x_t - m - mx)
        sum_exp_out = sum_exp_x - jnp.exp(x_t - mx) + jnp.exp(x_t - batch_m - mx)
        per_ldam = (mx + jnp.log(sum_exp_out)) - (x_t - batch_m)
    else:
        s32 = jnp.float32(s)
        logits = s32 * (x - masked_m)                          # s * output
        shift = s32 * mx                                       # >= max(logits): stable
        sum_exp_o = jnp.sum(jnp.exp(logits - shift), axis=1, keepdims=True)
        per_ldam = (shift + jnp.log(sum_exp_o)) - s32 * (x_t - batch_m)

    # Mask rows past the true batch size; statically skipped when N % TN == 0.
    if n_rows % block_rows != 0:
        row_ids = jax.lax.broadcasted_iota(jnp.int32, (tn, 1), 0)
        valid = (i * block_rows + row_ids) < n_rows
        per_ce = jnp.where(valid, per_ce, 0.0)
        per_ldam = jnp.where(valid, per_ldam, 0.0)

    ldam_ref[...] += jnp.sum(per_ldam, axis=(0, 1), keepdims=True)
    ce_ref[...] += jnp.sum(per_ce, axis=(0, 1), keepdims=True)

    @pl.when(i == pl.num_programs(0) - 1)
    def _():
        inv_n = jnp.float32(1.0 / n_rows)
        ldam_ref[...] = ldam_ref[...] * inv_n
        ce_ref[...] = ce_ref[...] * inv_n


def prepare_m_list(m_list, max_m=0.5):
    """One-time setup matching the module's __init__ rescale."""
    m = jnp.asarray(m_list, jnp.float32)
    return m * (max_m / jnp.max(m))


def _round_up(v, m):
    return ((v + m - 1) // m) * m


def ldam_loss_misclassification(x, target, m_list_scaled, *, s=1.0, block_rows=None):
    """JAX/Pallas equivalent of LDAMLoss_misclassification.forward (weight=None).

    x: (N, C) float logits (f32 or bf16), target: (N,) int, m_list_scaled: (C,)
    already rescaled by prepare_m_list.  Returns (loss_ldam, loss_ce) f32 scalars.
    """
    n, c = x.shape

    if block_rows is None:
        # Biggest tile whose f32 working set (a handful of (TN,C) temporaries +
        # double-buffered input DMAs) stays comfortably inside the 32 MiB
        # scoped-VMEM budget requested below.
        budget_bytes = 2 * 1024 * 1024
        rows_fit = max(8, (budget_bytes // (c * 4)) // 8 * 8)
        block_rows = min(rows_fit, 1024, _round_up(n, 8))
    block_rows = max(8, _round_up(min(block_rows, _round_up(n, 8)), 8))
    grid = (pl.cdiv(n, block_rows),)

    m_row = jnp.asarray(m_list_scaled, jnp.float32).reshape(1, c)
    tgt_col = target.astype(jnp.int32).reshape(n, 1)

    kernel = functools.partial(
        _ldam_kernel, s=float(s), n_rows=n, block_rows=block_rows
    )

    grid_spec = pltpu.PrefetchScalarGridSpec(
        num_scalar_prefetch=0,
        grid=grid,
        in_specs=[
            pl.BlockSpec((block_rows, c), lambda i: (i, 0)),   # x tile
            pl.BlockSpec((block_rows, 1), lambda i: (i, 0)),   # target tile
            pl.BlockSpec((1, c), lambda i: (0, 0)),            # m_list, resident
        ],
        out_specs=(
            pl.BlockSpec((1, 1), lambda i: (0, 0)),            # resident accumulator
            pl.BlockSpec((1, 1), lambda i: (0, 0)),
        ),
    )

    loss_ldam, loss_ce = pl.pallas_call(
        kernel,
        grid_spec=grid_spec,
        out_shape=(
            jax.ShapeDtypeStruct((1, 1), jnp.float32),
            jax.ShapeDtypeStruct((1, 1), jnp.float32),
        ),
        compiler_params=pltpu.CompilerParams(
            dimension_semantics=("arbitrary",),       # reduction over batch tiles
            vmem_limit_bytes=32 * 1024 * 1024,
        ),
    )(x, tgt_col, m_row)
    return loss_ldam[0, 0], loss_ce[0, 0]


def _reference(x, target, m_scaled, s):
    c = x.shape[1]
    onehot = jax.nn.one_hot(target, c, dtype=jnp.float32)
    x32 = x.astype(jnp.float32)
    batch_m = (onehot * m_scaled[None, :]).sum(axis=1, keepdims=True)
    out = s * (x32 - onehot * batch_m)
    lse = jax.scipy.special.logsumexp(out, axis=1)
    ref_ldam = jnp.mean(lse - (out * onehot).sum(axis=1))
    lse_x = jax.scipy.special.logsumexp(x32, axis=1)
    ref_ce = jnp.mean(lse_x - (x32 * onehot).sum(axis=1))
    return ref_ldam, ref_ce


if __name__ == "__main__":
    # Small, deterministic example: batch=10, num_classes=16.
    # block_rows=8 -> grid of 2 tiles, last tile partially valid (masking path).
    N, C = 10, 16
    key = jax.random.PRNGKey(0)
    kx, kt = jax.random.split(key)
    x = jax.random.normal(kx, (N, C), dtype=jnp.float32)
    target = jax.random.randint(kt, (N,), 0, C, dtype=jnp.int32)

    # Deterministic per-class margins (as typically derived from class counts),
    # rescaled once (hoisted __init__ step).
    cls_num = np.arange(1, C + 1, dtype=np.float32) * 10.0
    m_scaled = prepare_m_list(1.0 / np.sqrt(np.sqrt(cls_num)), max_m=0.5)

    # --- s == 1 path (exp-reuse) ---
    loss_ldam, loss_ce = ldam_loss_misclassification(
        x, target, m_scaled, s=1.0, block_rows=8
    )
    loss_ldam = jax.block_until_ready(loss_ldam)
    loss_ce = jax.block_until_ready(loss_ce)

    # Mirror the module's prints (host side).
    print("LDAM Loss is: ", float(loss_ldam))
    print("CE Loss is: ", float(loss_ce))

    ref_ldam, ref_ce = _reference(x, target, m_scaled, 1.0)
    assert jnp.allclose(loss_ldam, ref_ldam, atol=1e-5), (loss_ldam, ref_ldam)
    assert jnp.allclose(loss_ce, ref_ce, atol=1e-5), (loss_ce, ref_ce)

    # --- generic s path ---
    loss_ldam2, loss_ce2 = ldam_loss_misclassification(
        x, target, m_scaled, s=2.0, block_rows=8
    )
    ref_ldam2, ref_ce2 = _reference(x, target, m_scaled, 2.0)
    assert jnp.allclose(loss_ldam2, ref_ldam2, atol=1e-5), (loss_ldam2, ref_ldam2)
    assert jnp.allclose(loss_ce2, ref_ce2, atol=1e-5), (loss_ce2, ref_ce2)

    # --- exact-tiling path (mask statically skipped): N multiple of block_rows ---
    N2 = 16
    x2 = jax.random.normal(jax.random.PRNGKey(1), (N2, C), dtype=jnp.float32)
    t2 = jax.random.randint(jax.random.PRNGKey(2), (N2,), 0, C, dtype=jnp.int32)
    l3, c3 = ldam_loss_misclassification(x2, t2, m_scaled, s=1.0, block_rows=8)
    r3, rc3 = _reference(x2, t2, m_scaled, 1.0)
    assert jnp.allclose(l3, r3, atol=1e-5), (l3, r3)
    assert jnp.allclose(c3, rc3, atol=1e-5), (c3, rc3)

    # --- bf16 logits over HBM, f32 compute in-kernel ---
    loss_ldam_bf, loss_ce_bf = ldam_loss_misclassification(
        x.astype(jnp.bfloat16), target, m_scaled, s=1.0, block_rows=8
    )
    assert jnp.allclose(loss_ldam_bf, ref_ldam, atol=5e-2), (loss_ldam_bf, ref_ldam)
    assert jnp.allclose(loss_ce_bf, ref_ce, atol=5e-2), (loss_ce_bf, ref_ce)

    print("KERNEL_OK")
</pallas_src>

<mosaic_0001>
module attributes {stable_mosaic.version = 11 : i64} {
  func.func @_ldam_kernel(%arg0: i32, %arg1: memref<8x16xf32, #tpu.memory_space<vmem>>, %arg2: memref<8x1xi32, #tpu.memory_space<vmem>>, %arg3: memref<1x16xf32, #tpu.memory_space<vmem>>, %arg4: memref<1x1xf32, #tpu.memory_space<vmem>>, %arg5: memref<1x1xf32, #tpu.memory_space<vmem>>) attributes {dimension_semantics = [#tpu.dimension_semantics<arbitrary>], iteration_bounds = array<i64: 2>, scalar_prefetch = 0 : i64, scratch_operands = 0 : i64, tpu.core_type = #tpu.core_type<tc>, window_params = [{transform_indices = @transform_0, window_bounds = array<i64: 8, 16>}, {transform_indices = @transform_1, window_bounds = array<i64: 8, 1>}, {pipeline_mode = #tpu.pipeline_mode<synchronous>, transform_indices = @transform_2, window_bounds = array<i64: 1, 16>}, {pipeline_mode = #tpu.pipeline_mode<synchronous>, transform_indices = @transform_3, window_bounds = array<i64: 1, 1>}, {pipeline_mode = #tpu.pipeline_mode<synchronous>, transform_indices = @transform_4, window_bounds = array<i64: 1, 1>}]} {
    %c0_i32 = arith.constant 0 : i32
    %0 = arith.cmpi eq, %arg0, %c0_i32 : i32
    %1 = arith.extui %0 : i1 to i32
    %c0_i32_0 = arith.constant 0 : i32
    %2 = arith.cmpi ne, %1, %c0_i32_0 : i32
    scf.if %2 {
      %cst_22 = arith.constant 0.000000e+00 : f32
      %68 = vector.broadcast %cst_22 : f32 to vector<1x1xf32>
      %c0_23 = arith.constant 0 : index
      %c0_24 = arith.constant 0 : index
      %69 = vector.load %arg4[%c0_23, %c0_24] : memref<1x1xf32, #tpu.memory_space<vmem>>, vector<1x1xf32>
      tpu.vector_store %arg4[%c0_23, %c0_24], %68 {strides = array<i32>} : memref<1x1xf32, #tpu.memory_space<vmem>>, vector<1x1xf32>,
      %cst_25 = arith.constant 0.000000e+00 : f32
      %70 = vector.broadcast %cst_25 : f32 to vector<1x1xf32>
      %c0_26 = arith.constant 0 : index
      %c0_27 = arith.constant 0 : index
      %71 = vector.load %arg5[%c0_26, %c0_27] : memref<1x1xf32, #tpu.memory_space<vmem>>, vector<1x1xf32>
      tpu.vector_store %arg5[%c0_26, %c0_27], %70 {strides = array<i32>} : memref<1x1xf32, #tpu.memory_space<vmem>>, vector<1x1xf32>,
    } else {
    }
    %c0 = arith.constant 0 : index
    %c0_1 = arith.constant 0 : index
    %3 = vector.load %arg1[%c0, %c0_1] : memref<8x16xf32, #tpu.memory_space<vmem>>, vector<8x16xf32>
    %c0_2 = arith.constant 0 : index
    %c0_3 = arith.constant 0 : index
    %4 = vector.load %arg2[%c0_2, %c0_3] : memref<8x1xi32, #tpu.memory_space<vmem>>, vector<8x1xi32>
    %c0_4 = arith.constant 0 : index
    %c0_5 = arith.constant 0 : index
    %5 = vector.load %arg3[%c0_4, %c0_5] : memref<1x16xf32, #tpu.memory_space<vmem>>, vector<1x16xf32>
    %6 = tpu.iota {dimensions = array<i32: 1>} : vector<8x16xi32>
    %7 = vector.broadcast %4 : vector<8x1xi32> to vector<8x16xi32>
    %8 = arith.cmpi eq, %6, %7 : vector<8x16xi32>
    %9 = arith.extui %8 : vector<8x16xi1> to vector<8x16xi32>
    %10 = arith.sitofp %9 : vector<8x16xi32> to vector<8x16xf32>
    %11 = vector.broadcast %5 : vector<1x16xf32> to vector<8x16xf32>
    %12 = arith.mulf %10, %11 : vector<8x16xf32>
    %13 = arith.mulf %3, %10 : vector<8x16xf32>
    %cst = arith.constant dense<0.000000e+00> : vector<8xf32>
    %14 = vector.multi_reduction <add>, %13, %cst [1] : vector<8x16xf32> to vector<8xf32>
    %15 = vector.shape_cast %14 : vector<8xf32> to vector<8x1xf32>
    %cst_6 = arith.constant dense<0.000000e+00> : vector<8xf32>
    %16 = vector.multi_reduction <add>, %12, %cst_6 [1] : vector<8x16xf32> to vector<8xf32>
    %17 = vector.shape_cast %16 : vector<8xf32> to vector<8x1xf32>
    %cst_7 = arith.constant dense<0xFF800000> : vector<8xf32>
    %18 = vector.multi_reduction <maximumf>, %3, %cst_7 [1] : vector<8x16xf32> to vector<8xf32>
    %19 = vector.shape_cast %18 : vector<8xf32> to vector<8x1xf32>
    %20 = vector.broadcast %19 : vector<8x1xf32> to vector<8x16xf32>
    %21 = arith.subf %3, %20 : vector<8x16xf32>
    %22 = math.exp %21 : vector<8x16xf32>
    %cst_8 = arith.constant dense<0.000000e+00> : vector<8xf32>
    %23 = vector.multi_reduction <add>, %22, %cst_8 [1] : vector<8x16xf32> to vector<8xf32>
    %24 = vector.shape_cast %23 : vector<8xf32> to vector<8x1xf32>
    %25 = math.log %24 : vector<8x1xf32>
    %26 = arith.addf %19, %25 : vector<8x1xf32>
    %27 = arith.subf %26, %15 : vector<8x1xf32>
    %28 = arith.subf %15, %19 : vector<8x1xf32>
    %29 = math.exp %28 : vector<8x1xf32>
    %30 = arith.subf %24, %29 : vector<8x1xf32>
    %31 = arith.subf %15, %17 : vector<8x1xf32>
    %32 = arith.subf %31, %19 : vector<8x1xf32>
    %33 = math.exp %32 : vector<8x1xf32>
    %34 = arith.addf %30, %33 : vector<8x1xf32>
    %35 = math.log %34 : vector<8x1xf32>
    %36 = arith.addf %19, %35 : vector<8x1xf32>
    %37 = arith.subf %15, %17 : vector<8x1xf32>
    %38 = arith.subf %36, %37 : vector<8x1xf32>
    %39 = tpu.iota {dimensions = array<i32: 0>} : vector<8x1xi32>
    %c8_i32 = arith.constant 8 : i32
    %40 = arith.muli %arg0, %c8_i32 : i32
    %41 = vector.broadcast %40 : i32 to vector<8x1xi32>
    %42 = arith.addi %41, %39 : vector<8x1xi32>
    %c10_i32 = arith.constant 10 : i32
    %43 = vector.broadcast %c10_i32 : i32 to vector<8x1xi32>
    %44 = arith.cmpi slt, %42, %43 : vector<8x1xi32>
    %cst_9 = arith.constant 0.000000e+00 : f32
    %45 = vector.broadcast %cst_9 : f32 to vector<8x1xf32>
    %46 = arith.select %44, %27, %45 : vector<8x1xi1>, vector<8x1xf32>
    %cst_10 = arith.constant 0.000000e+00 : f32
    %47 = vector.broadcast %cst_10 : f32 to vector<8x1xf32>
    %48 = arith.select %44, %38, %47 : vector<8x1xi1>, vector<8x1xf32>
    %c0_11 = arith.constant 0 : index
    %c0_12 = arith.constant 0 : index
    %49 = vector.load %arg4[%c0_11, %c0_12] : memref<1x1xf32, #tpu.memory_space<vmem>>, vector<1x1xf32>
    %50 = vector.shape_cast %48 : vector<8x1xf32> to vector<1x8x1xf32>
    %cst_13 = arith.constant dense<0.000000e+00> : vector<1xf32>
    %51 = vector.multi_reduction <add>, %50, %cst_13 [1, 2] : vector<1x8x1xf32> to vector<1xf32>
    %52 = vector.shape_cast %51 : vector<1xf32> to vector<1x1x1xf32>
    %53 = vector.extract %52[0, 0, 0] : f32 from vector<1x1x1xf32>
    %54 = vector.broadcast %53 : f32 to vector<1x1xf32>
    %55 = arith.addf %49, %54 : vector<1x1xf32>
    %c0_14 = arith.constant 0 : index
    %c0_15 = arith.constant 0 : index
    %56 = vector.load %arg4[%c0_14, %c0_15] : memref<1x1xf32, #tpu.memory_space<vmem>>, vector<1x1xf32>
    tpu.vector_store %arg4[%c0_14, %c0_15], %55 {strides = array<i32>} : memref<1x1xf32, #tpu.memory_space<vmem>>, vector<1x1xf32>,
    %c0_16 = arith.constant 0 : index
    %c0_17 = arith.constant 0 : index
    %57 = vector.load %arg5[%c0_16, %c0_17] : memref<1x1xf32, #tpu.memory_space<vmem>>, vector<1x1xf32>
    %58 = vector.shape_cast %46 : vector<8x1xf32> to vector<1x8x1xf32>
    %cst_18 = arith.constant dense<0.000000e+00> : vector<1xf32>
    %59 = vector.multi_reduction <add>, %58, %cst_18 [1, 2] : vector<1x8x1xf32> to vector<1xf32>
    %60 = vector.shape_cast %59 : vector<1xf32> to vector<1x1x1xf32>
    %61 = vector.extract %60[0, 0, 0] : f32 from vector<1x1x1xf32>
    %62 = vector.broadcast %61 : f32 to vector<1x1xf32>
    %63 = arith.addf %57, %62 : vector<1x1xf32>
    %c0_19 = arith.constant 0 : index
    %c0_20 = arith.constant 0 : index
    %64 = vector.load %arg5[%c0_19, %c0_20] : memref<1x1xf32, #tpu.memory_space<vmem>>, vector<1x1xf32>
    tpu.vector_store %arg5[%c0_19, %c0_20], %63 {strides = array<i32>} : memref<1x1xf32, #tpu.memory_space<vmem>>, vector<1x1xf32>,
    %c1_i32 = arith.constant 1 : i32
    %65 = arith.cmpi eq, %arg0, %c1_i32 : i32
    %66 = arith.extui %65 : i1 to i32
    %c0_i32_21 = arith.constant 0 : i32
    %67 = arith.cmpi ne, %66, %c0_i32_21 : i32
    scf.if %67 {
      %c0_22 = arith.constant 0 : index
      %c0_23 = arith.constant 0 : index
      %68 = vector.load %arg4[%c0_22, %c0_23] : memref<1x1xf32, #tpu.memory_space<vmem>>, vector<1x1xf32>
      %cst_24 = arith.constant 1.000000e-01 : f32
      %69 = vector.broadcast %cst_24 : f32 to vector<1x1xf32>
      %70 = arith.mulf %68, %69 : vector<1x1xf32>
      %c0_25 = arith.constant 0 : index
      %c0_26 = arith.constant 0 : index
      %71 = vector.load %arg4[%c0_25, %c0_26] : memref<1x1xf32, #tpu.memory_space<vmem>>, vector<1x1xf32>
      tpu.vector_store %arg4[%c0_25, %c0_26], %70 {strides = array<i32>} : memref<1x1xf32, #tpu.memory_space<vmem>>, vector<1x1xf32>,
      %c0_27 = arith.constant 0 : index
      %c0_28 = arith.constant 0 : index
      %72 = vector.load %arg5[%c0_27, %c0_28] : memref<1x1xf32, #tpu.memory_space<vmem>>, vector<1x1xf32>
      %cst_29 = arith.constant 1.000000e-01 : f32
      %73 = vector.broadcast %cst_29 : f32 to vector<1x1xf32>
      %74 = arith.mulf %72, %73 : vector<1x1xf32>
      %c0_30 = arith.constant 0 : index
      %c0_31 = arith.constant 0 : index
      %75 = vector.load %arg5[%c0_30, %c0_31] : memref<1x1xf32, #tpu.memory_space<vmem>>, vector<1x1xf32>
      tpu.vector_store %arg5[%c0_30, %c0_31], %74 {strides = array<i32>} : memref<1x1xf32, #tpu.memory_space<vmem>>, vector<1x1xf32>,
    } else {
    }
    return
  }
  func.func @transform_0(%arg0: i32) -> (i32, i32) {
    %c0_i32 = arith.constant 0 : i32
    %c0_i32_0 = arith.constant 0 : i32
    return %arg0, %c0_i32 : i32, i32
  }
  func.func @transform_1(%arg0: i32) -> (i32, i32) {
    %c0_i32 = arith.constant 0 : i32
    %c0_i32_0 = arith.constant 0 : i32
    return %arg0, %c0_i32 : i32, i32
  }
  func.func @transform_2(%arg0: i32) -> (i32, i32) {
    %c0_i32 = arith.constant 0 : i32
    %c0_i32_0 = arith.constant 0 : i32
    %c0_i32_1 = arith.constant 0 : i32
    return %c0_i32, %c0_i32_0 : i32, i32
  }
  func.func @transform_3(%arg0: i32) -> (i32, i32) {
    %c0_i32 = arith.constant 0 : i32
    %c0_i32_0 = arith.constant 0 : i32
    %c0_i32_1 = arith.constant 0 : i32
    return %c0_i32, %c0_i32_0 : i32, i32
  }
  func.func @transform_4(%arg0: i32) -> (i32, i32) {
    %c0_i32 = arith.constant 0 : i32
    %c0_i32_0 = arith.constant 0 : i32
    %c0_i32_1 = arith.constant 0 : i32
    return %c0_i32, %c0_i32_0 : i32, i32
  }
}

</mosaic_0001>

<llo_original>
// kernel: tpu_custom_call.1
$region0: #{tpu_custom_call.1}
  #allocation0 [shape = 'u32[]', space=smem, size = 0x4, offset = 0x4, fixed_abs, tag = 'smem constant byte address 0x4 - core index']
  #allocation1 [shape = 'u32[72,128]{1,0:T(1,128)}', space=vmem, size = 0x9000, scoped, tag = 'internal scratch']
  %s0 = inlined_call_operand.vmem [shape: f32[10,16], index: 0, kind: input, shape index: {}]
  %s1 = inlined_call_operand.vmem [shape: s32[10,1], index: 1, kind: input, shape index: {}]
  %s2 = inlined_call_operand.vmem [shape: f32[1,16], index: 2, kind: input, shape index: {}]
  %s3 = inlined_call_operand.hbm [shape: f32[1,1], index: 3, kind: output, shape index: {0}]
  %s4 = inlined_call_operand.hbm [shape: f32[1,1], index: 4, kind: output, shape index: {1}]
  %5 = xla_tuple %s3, %s4
  %s6 = sld [smem:[#allocation0]]
  $region61: #{tpu_custom_call.1} parent=0
    _
  %s8 = ssub.s32 1, %s6
  %s9 = scalar_select 0, %s8, %s6
  $region1: #{tpu_custom_call.1} parent=0
    #allocation2 [shape = 'u8[512]{0}', space=vmem, size = 0x400, scoped, tag = 'output window, operand 0, single buffered']
    #allocation3 [shape = 's32[2]{0}', space=sflag, size = 0x8, scoped, tag = 'scoped memory for tpu_custom_call.1']
    #allocation4 [shape = 'u8[512]{0}', space=vmem, size = 0x400, scoped, tag = 'output window, operand 1, single buffered']
    #allocation5 [shape = 's32[1]{0}', space=sflag, size = 0x4, scoped, tag = 'scoped memory for tpu_custom_call.1']
    %10 = vsyncpa [#allocation3], 0
    %11 = vsyncpa [#allocation5], 0
    loop: start=0, step=1, limit=4
    $region2: #{tpu_custom_call.1} parent=1 // loop_pre_header
      _
    $region3: #{tpu_custom_call.1} parent=1 // loop_header
      %s13 = sphi 0, %s17
      %p14 = scmp.ge.s32.totalorder %s13, 4
      %s23 = sphi 0, %s25
      %s26 = sphi 0, %s23
      %s27 = sphi 0, %s26
      %s43 = sphi 0, %s27
      %s49 = sphi 0, %s51
      %s52 = sphi 0, %s49
      %s53 = sphi 0, %s52
      %s69 = sphi 0, %s53
      %s73 = sphi 0, %s73
      %s75 = sphi 0, %s73
      %s76 = sphi 0, %s75
      %s90 = sphi 0, %s76
      %s94 = sphi 0, %s94
      %s96 = sphi 0, %s94
      %s97 = sphi 0, %s96
      %s111 = sphi 0, %s97
      %s115 = sphi 0, %s115
      %s117 = sphi 0, %s115
      %s118 = sphi 0, %s117
      %s132 = sphi 0, %s118
    $region4: #{tpu_custom_call.1} parent=1 // loop_header_branch
      %16 = sbr.rel (%p14) target = $region8
    $region5: #{tpu_custom_call.1} parent=1 // loop_body
      %s18 = ssub.s32 %s13, 1
      %s19 = ssub.s32 %s13, 2
      %s20 = sadd.s32 %s13, 1
      %s21 = ssub.s32 %s13, %s20
      %p22 = scmp.eq.s32.totalorder %s21, 0
      %s24 = sadd.s32 %s23, 1
      %s25 = scalar_select %p22, %s23, %s24
      %p28 = pneg %p22
      %p29 = scmp.eq.s32.totalorder %s13, 1
      %p30 = por %p28, %p29
      %p31 = scmp.ne.s32.totalorder %s23, %s26
      %p32 = scmp.eq.s32.totalorder %s13, 0
      %p33 = por %p31, %p32
      %p34 = scmp.ne.s32.totalorder %s23, %s26
      %p35 = scmp.eq.s32.totalorder %s18, 1
      %p36 = por %p34, %p35
      %p37 = scmp.ne.s32.totalorder %s26, %s27
      %p38 = scmp.eq.s32.totalorder %s18, 0
      %p39 = por %p37, %p38
      %p40 = scmp.ne.s32.totalorder %s26, %s27
      %p41 = scmp.eq.s32.totalorder %s19, 1
      %p42 = por %p40, %p41
      %p44 = scmp.ne.s32.totalorder %s27, %s43
      %p45 = scmp.eq.s32.totalorder %s19, 0
      %p46 = por %p44, %p45
      %s47 = ssub.s32 %s13, %s20
      %p48 = scmp.eq.s32.totalorder %s47, 0
      %s50 = sadd.s32 %s49, 1
      %s51 = scalar_select %p48, %s49, %s50
      %p54 = pneg %p48
      %p55 = scmp.eq.s32.totalorder %s13, 1
      %p56 = por %p54, %p55
      %p57 = scmp.ne.s32.totalorder %s49, %s52
      %p58 = scmp.eq.s32.totalorder %s13, 0
      %p59 = por %p57, %p58
      %p60 = scmp.ne.s32.totalorder %s49, %s52
      %p61 = scmp.eq.s32.totalorder %s18, 1
      %p62 = por %p60, %p61
      %p63 = scmp.ne.s32.totalorder %s52, %s53
      %p64 = scmp.eq.s32.totalorder %s18, 0
      %p65 = por %p63, %p64
      %p66 = scmp.ne.s32.totalorder %s52, %s53
      %p67 = scmp.eq.s32.totalorder %s19, 1
      %p68 = por %p66, %p67
      %p70 = scmp.ne.s32.totalorder %s53, %s69
      %p71 = scmp.eq.s32.totalorder %s19, 0
      %p72 = por %p70, %p71
      %s74 = sadd.s32 %s73, 1
      %p77 = scmp.eq.s32.totalorder %s13, 1
      %p78 = scmp.ne.s32.totalorder %s73, %s75
      %p79 = scmp.eq.s32.totalorder %s13, 0
      %p80 = por %p78, %p79
      %p81 = scmp.ne.s32.totalorder %s73, %s75
      %p82 = scmp.eq.s32.totalorder %s18, 1
      %p83 = por %p81, %p82
      %p84 = scmp.ne.s32.totalorder %s75, %s76
      %p85 = scmp.eq.s32.totalorder %s18, 0
      %p86 = por %p84, %p85
      %p87 = scmp.ne.s32.totalorder %s75, %s76
      %p88 = scmp.eq.s32.totalorder %s19, 1
      %p89 = por %p87, %p88
      %p91 = scmp.ne.s32.totalorder %s76, %s90
      %p92 = scmp.eq.s32.totalorder %s19, 0
      %p93 = por %p91, %p92
      %s95 = sadd.s32 %s94, 1
      %p98 = scmp.eq.s32.totalorder %s13, 1
      %p99 = scmp.ne.s32.totalorder %s94, %s96
      %p100 = scmp.eq.s32.totalorder %s13, 0
      %p101 = por %p99, %p100
      %p102 = scmp.ne.s32.totalorder %s94, %s96
      %p103 = scmp.eq.s32.totalorder %s18, 1
      %p104 = por %p102, %p103
      %p105 = scmp.ne.s32.totalorder %s96, %s97
      %p106 = scmp.eq.s32.totalorder %s18, 0
      %p107 = por %p105, %p106
      %p108 = scmp.ne.s32.totalorder %s96, %s97
      %p109 = scmp.eq.s32.totalorder %s19, 1
      %p110 = por %p108, %p109
      %p112 = scmp.ne.s32.totalorder %s97, %s111
      %p113 = scmp.eq.s32.totalorder %s19, 0
      %p114 = por %p112, %p113
      %s116 = sadd.s32 %s115, 1
      %p119 = scmp.eq.s32.totalorder %s13, 1
      %p120 = scmp.ne.s32.totalorder %s115, %s117
      %p121 = scmp.eq.s32.totalorder %s13, 0
      %p122 = por %p120, %p121
      %p123 = scmp.ne.s32.totalorder %s115, %s117
      %p124 = scmp.eq.s32.totalorder %s18, 1
      %p125 = por %p123, %p124
      %p126 = scmp.ne.s32.totalorder %s117, %s118
      %p127 = scmp.eq.s32.totalorder %s18, 0
      %p128 = por %p126, %p127
      %p129 = scmp.ne.s32.totalorder %s117, %s118
      %p130 = scmp.eq.s32.totalorder %s19, 1
      %p131 = por %p129, %p130
      %p133 = scmp.ne.s32.totalorder %s118, %s132
      %p134 = scmp.eq.s32.totalorder %s19, 0
      %p135 = por %p133, %p134
      %p136 = scmp.le.s32.totalorder 1, %s13
      %p137 = scmp.lt.s32.totalorder %s13, 3
      %p138 = pnand %p136, %p137
      %p139 = pneg %p138
      // Predicated region
      $region9: #{tpu_custom_call.1} parent=5 // pred_check
        _
      $region10: #{tpu_custom_call.1} parent=5 // pred_check_branch
        %141 = sbr.rel (%p138) target = $region12
      $region11: #{tpu_custom_call.1} parent=5 // pred_region
        %s142 = ssub.s32 %s13, 1
        // Predicated region
        $region13: #{tpu_custom_call.1} parent=11 // pred_check
          %p143 = pneg %p86
        $region14: #{tpu_custom_call.1} parent=11 // pred_check_branch
          %145 = sbr.rel (%p143) target = $region16
        $region15: #{tpu_custom_call.1} parent=11 // pred_region
          _
        $region16: #{tpu_custom_call.1} parent=11 // pred_fallthru
          _
      $region12: #{tpu_custom_call.1} parent=5 // pred_fallthru
        _
      %p146 = scmp.lt.s32.totalorder %s13, 2
      // Predicated region
      $region17: #{tpu_custom_call.1} parent=5 // pred_check
        %p147 = pneg %p146
      $region18: #{tpu_custom_call.1} parent=5 // pred_check_branch
        %149 = sbr.rel (%p147) target = $region20
      $region19: #{tpu_custom_call.1} parent=5 // pred_region
        // Predicated region
        $region21: #{tpu_custom_call.1} parent=19 // pred_check
          %p150 = pneg %p33
        $region22: #{tpu_custom_call.1} parent=19 // pred_check_branch
          %152 = sbr.rel (%p150) target = $region24
        $region23: #{tpu_custom_call.1} parent=19 // pred_region
          %p153 = scmp.lt.s32.totalorder %s13, 1
          %s154 = scalar_select %p153, %s13, 1
          %s155 = smul.addr %s154, 8
          %s156 = scalar_lea.vmem %s0, %s155
        $region24: #{tpu_custom_call.1} parent=19 // pred_fallthru
          _
        // Predicated region
        $region25: #{tpu_custom_call.1} parent=19 // pred_check
          %p157 = pneg %p59
        $region26: #{tpu_custom_call.1} parent=19 // pred_check_branch
          %159 = sbr.rel (%p157) target = $region28
        $region27: #{tpu_custom_call.1} parent=19 // pred_region
          %p160 = scmp.lt.s32.totalorder %s13, 1
          %s161 = scalar_select %p160, %s13, 1
          %s162 = smul.addr %s161, 8
          %s163 = scalar_lea.vmem %s1, %s162
        $region28: #{tpu_custom_call.1} parent=19 // pred_fallthru
          _
      $region20: #{tpu_custom_call.1} parent=5 // pred_fallthru
        _
      %p164 = scmp.le.s32.totalorder 1, %s13
      %p165 = scmp.lt.s32.totalorder %s13, 3
      %p166 = pnand %p164, %p165
      %p167 = pneg %p166
      // Predicated region
      $region29: #{tpu_custom_call.1} parent=5 // pred_check
        _
      $region30: #{tpu_custom_call.1} parent=5 // pred_check_branch
        %169 = sbr.rel (%p166) target = $region32
      $region31: #{tpu_custom_call.1} parent=5 // pred_region
        %s170 = ssub.s32 %s13, 1
        %p171 = scmp.lt.s32.totalorder %s18, 1
        %s172 = scalar_select %p171, %s18, 1
        %s173 = smul.addr %s172, 8
        %s174 = scalar_lea.vmem %s0, %s173
        %p175 = pneg %p39
        %p176 = pneg %p36
        %p177 = scmp.lt.s32.totalorder %s18, 1
        %s178 = scalar_select %p177, %s18, 1
        %s179 = smul.addr %s178, 8
        %s180 = scalar_lea.vmem %s1, %s179
        %p181 = pneg %p65
        %p182 = pneg %p62
        %p183 = pneg %p86
        %p184 = pneg %p83
        %p185 = pneg %p107
        %p186 = pneg %p104
        %p187 = pneg %p128
        %p188 = pneg %p125
        %p189 = scmp.lt.s32.totalorder %s18, 1
        %s190 = scalar_select %p189, %s18, 1
        %s191 = smul.addr %s190, 8
        %s192 = scalar_lea.vmem %s0, %s191
        %p193 = scmp.lt.s32.totalorder %s18, 1
        %s194 = scalar_select %p193, %s18, 1
        %s195 = smul.addr %s194, 8
        %s196 = scalar_lea.vmem %s1, %s195
        %p197 = scmp.eq.s32.totalorder %s18, 0
        // Predicated region
        $region33: #{tpu_custom_call.1} parent=31 // pred_check
          %p198 = pneg %p197
        $region34: #{tpu_custom_call.1} parent=31 // pred_check_branch
          %200 = sbr.rel (%p198) target = $region36
        $region35: #{tpu_custom_call.1} parent=31 // pred_region
          %vm201 = vcmask 0
          %202 = vst.msk [vmem:[#allocation2] sm:$0x1] %vm201, 0.0
          %203 = vst.msk [vmem:[#allocation4] sm:$0x1] %vm201, 0.0
        $region36: #{tpu_custom_call.1} parent=31 // pred_fallthru
          _
        %v204 = vld [vmem:[%s192] sm:$0xff]
        %v205 = vld [vmem:[%s196] sm:$0xff]
        %v206 = vld [vmem:[%s2] sm:$0x1]
        %v207 = vlaneseq
        %v208 = vand.u32 %v207, 127
        %209 = vset.pattern.permute.xlu0 0
        %210 = vperm.xlu0 %209, %v205
        %v211 = vpop.permute.xlu0 %210
        %vm212 = vcmp.eq.s32.totalorder %v208, %v211
        %v213 = vsel %vm212, 1, 0
        %v214 = vcvt.s32.f32 %v213
        %v216 = vperm.slane %v206, 0
        %v218 = vmul.f32 %v214, %v216
        %v219 = vmul.f32 %v204, %v214
        %vm220 = vcmask 130048
        %v221 = vsel %vm220, %v219, 0.0
        %222 = vadd.xlane.f32.xlu0 %v221
        %v223 = vpop.xlane.xlu0 %222
        %v224 = vsel %vm220, %v218, 0.0
        %225 = vadd.xlane.f32.xlu0 %v224
        %v226 = vpop.xlane.xlu0 %225
        %v227 = vsel %vm220, %v204, -inf
        %228 = vmax.xlane.f32.xlu0 %v227
        %v229 = vpop.xlane.xlu0 %228
        %v230 = vsub.f32 %v204, %v229
        %v231 = vmul.f32 %v230, 1.442695
        %v232 = vpow.pop %v231
        %v233 = vsel %vm220, %v232, 0.0
        %234 = vadd.xlane.f32.xlu0 %v233
        %v235 = vpop.xlane.xlu0 %234
        %v236 = vlog2.pop %v235
        %v237 = vmul.f32 %v236, 0.6931472
        %v238 = vadd.f32 %v229, %v237
        %v239 = vsub.f32 %v238, %v223
        %v240 = vsub.f32 %v223, %v229
        %v241 = vmul.f32 %v240, 1.442695
        %v242 = vpow.pop %v241
        %v243 = vsub.f32 %v235, %v242
        %v244 = vsub.f32 %v223, %v226
        %v245 = vsub.f32 %v244, %v229
        %v246 = vmul.f32 %v245, 1.442695
        %v247 = vpow.pop %v246
        %v248 = vadd.f32 %v243, %v247
        %v249 = vlog2.pop %v248
        %v250 = vmul.f32 %v249, 0.6931472
        %v251 = vadd.f32 %v229, %v250
        %v252 = vsub.f32 %v251, %v244
        %v253 = vlaneseq
        %v254 = vshrl.u32 %v253, 7
        %s255 = smul.u32 %s18, 8
        %v256 = vstv %s255
        %v257 = vadd.s32 %v256, %v254
        %vm258 = vcmp.lt.s32.totalorder %v257, 10
        %v259 = vsel %vm258, %v239, 0.0
        %v260 = vsel %vm258, %v252, 0.0
        %v261 = vld [vmem:[#allocation2] sm:$0x1]
        %vm262 = vcmask 7168
        %v263 = vsel %vm262, %v260, 0.0
        %264 = vadd.xlane.f32.xlu0 %v263
        %v265 = vpop.xlane.xlu0 %264
        %v266 = vrot.slane %v265, 4
        %v267 = vadd.f32 %v265, %v266
        %v268 = vrot.slane %v267, 2
        %v269 = vadd.f32 %v267, %v268
        %v270 = vrot.slane %v269, 1
        %v271 = vadd.f32 %v269, %v270
        %s272 = vtos %v271
        %v273 = vstv %s272
        %v274 = vadd.f32 %v261, %v273
        %vm275 = vcmask 0
        %276 = vst.msk [vmem:[#allocation2] sm:$0x1] %vm275, %v274
        %v277 = vld [vmem:[#allocation4] sm:$0x1]
        %v278 = vsel %vm262, %v259, 0.0
        %279 = vadd.xlane.f32.xlu0 %v278
        %v280 = vpop.xlane.xlu0 %279
        %v281 = vrot.slane %v280, 4
        %v282 = vadd.f32 %v280, %v281
        %v283 = vrot.slane %v282, 2
        %v284 = vadd.f32 %v282, %v283
        %v285 = vrot.slane %v284, 1
        %v286 = vadd.f32 %v284, %v285
        %s287 = vtos %v286
        %v288 = vstv %s287
        %v289 = vadd.f32 %v277, %v288
        %290 = vst.msk [vmem:[#allocation4] sm:$0x1] %vm275, %v289
        %p291 = scmp.eq.s32.totalorder %s18, 1
        // Predicated region
        $region37: #{tpu_custom_call.1} parent=31 // pred_check
          %p292 = pneg %p291
        $region38: #{tpu_custom_call.1} parent=31 // pred_check_branch
          %294 = sbr.rel (%p292) target = $region40
        $region39: #{tpu_custom_call.1} parent=31 // pred_region
          %v295 = vld [vmem:[#allocation2] sm:$0x1]
          %v296 = vmul.f32 %v295, 0.1
          %297 = vst.msk [vmem:[#allocation2] sm:$0x1] %vm275, %v296
          %v298 = vld [vmem:[#allocation4] sm:$0x1]
          %v299 = vmul.f32 %v298, 0.1
          %300 = vst.msk [vmem:[#allocation4] sm:$0x1] %vm275, %v299
        $region40: #{tpu_custom_call.1} parent=31 // pred_fallthru
          _
        // Predicated region
        $region41: #{tpu_custom_call.1} parent=31 // pred_check
          %p301 = pneg %p104
        $region42: #{tpu_custom_call.1} parent=31 // pred_check_branch
          %303 = sbr.rel (%p301) target = $region44
        $region43: #{tpu_custom_call.1} parent=31 // pred_region
          %305 = vsyncadd [#allocation3], 0
          %s307 = sshll.u32 [#allocation2], 4
          %s308 = int_to_ptr.vmem [resolvable:$true] %s307
          %s309 = sshll.u32 %s3, 4
          %s310 = int_to_ptr.hbm [resolvable:$true] %s309
          %312 = dma.vmem_to_hbm [thread:$0]  %s308, 16, %s310, [#allocation3]
        $region44: #{tpu_custom_call.1} parent=31 // pred_fallthru
          _
        // Predicated region
        $region45: #{tpu_custom_call.1} parent=31 // pred_check
          %p313 = pneg %p125
        $region46: #{tpu_custom_call.1} parent=31 // pred_check_branch
          %315 = sbr.rel (%p313) target = $region48
        $region47: #{tpu_custom_call.1} parent=31 // pred_region
          %317 = vsyncadd [#allocation5], 0
          %s319 = sshll.u32 [#allocation4], 4
          %s320 = int_to_ptr.vmem [resolvable:$true] %s319
          %s321 = sshll.u32 %s4, 4
          %s322 = int_to_ptr.hbm [resolvable:$true] %s321
          %324 = dma.vmem_to_hbm [thread:$0]  %s320, 16, %s322, [#allocation5]
        $region48: #{tpu_custom_call.1} parent=31 // pred_fallthru
          _
        // Predicated region
        $region49: #{tpu_custom_call.1} parent=31 // pred_check
          %p325 = pneg %p104
        $region50: #{tpu_custom_call.1} parent=31 // pred_check_branch
          %327 = sbr.rel (%p325) target = $region52
        $region51: #{tpu_custom_call.1} parent=31 // pred_region
          %329 = dma.done [#allocation3], 16
        $region52: #{tpu_custom_call.1} parent=31 // pred_fallthru
          _
        // Predicated region
        $region53: #{tpu_custom_call.1} parent=31 // pred_check
          %p330 = pneg %p125
        $region54: #{tpu_custom_call.1} parent=31 // pred_check_branch
          %332 = sbr.rel (%p330) target = $region56
        $region55: #{tpu_custom_call.1} parent=31 // pred_region
          %334 = dma.done [#allocation5], 16
        $region56: #{tpu_custom_call.1} parent=31 // pred_fallthru
          _
      $region32: #{tpu_custom_call.1} parent=5 // pred_fallthru
        _
      %p335 = scmp.le.s32.totalorder 2, %s13
      // Predicated region
      $region57: #{tpu_custom_call.1} parent=5 // pred_check
        %p336 = pneg %p335
      $region58: #{tpu_custom_call.1} parent=5 // pred_check_branch
        %338 = sbr.rel (%p336) target = $region60
      $region59: #{tpu_custom_call.1} parent=5 // pred_region
        %s339 = ssub.s32 %s13, 2
      $region60: #{tpu_custom_call.1} parent=5 // pred_fallthru
        _
    $region6: #{tpu_custom_call.1} parent=1 // loop_footer
      %s17 = sadd.s32 1, %s13
    $region7: #{tpu_custom_call.1} parent=1 // loop_footer_branch
      %12 = sbr.rel target = $region3
    $region8: #{tpu_custom_call.1} parent=1 // loop_exit
      _
    %340 = vsyncpa [#allocation3], 1
    %s341 = scalar_lea.sflag [#allocation3], 1
    %342 = vsyncpa %s341, 1
    %343 = vsyncpa [#allocation5], 1

</llo_original>
